<compile_context>
chip_gen: v7x
topology: tpu7x:2x2x1
jax: 0.10.0
libtpu: 0.0.40
codegen_flags: <defaults>
</compile_context>

<pallas_src>
import jax
import jax.numpy as jnp
from jax.experimental import pallas as pl
from jax.experimental.pallas import tpu as pltpu


def _round_up(x: int, m: int) -> int:
    return (x + m - 1) // m * m


def _pick_tile(total: int, candidates=(512, 256, 128)) -> int:
    for c in candidates:
        if total % c == 0:
            return c
    return total


def _vmem_limit_bytes() -> int:
    """Per-generation scoped-VMEM budget: ~100 MiB on 128 MiB parts (v5e/v6e),
    48 MiB on 64 MiB parts (v7x).  Conservative fallback if the query fails."""
    cap = 64 << 20
    try:
        info = pltpu.get_tpu_info()
        cap = int(getattr(info, "vmem_capacity_bytes", cap))
    except Exception:
        pass
    return (100 << 20) if cap >= (100 << 20) else (48 << 20)


def _select_tiles(M, Hp, Vp, vmem_limit, *, tm_max=512, tn_max=512):
    """Largest token tile that fits the VMEM budget (double-buffered streams,
    resident encoder weight, bf16 h scratch), clamped to a multiple of 16."""
    tn = _pick_tile(Vp, (tn_max, 256, 128))
    budget = vmem_limit - (4 << 20)                      # compiler headroom
    w_enc_bytes = (Hp * Hp * 2) * (1 if Hp >= 512 else 2)  # single-buf when large
    tm = 128
    for cand in (tm_max, 256, 128):
        need = (2 * cand * Hp * 2        # activation blocks (bf16, 2-deep)
                + w_enc_bytes            # resident encoder weight
                + 2 * Hp * tn * 2        # streamed w_dec blocks (bf16, 2-deep)
                + 2 * cand * tn * 4      # f32 output blocks (2-deep)
                + cand * Hp * 2)         # bf16 encoder scratch
        if need <= budget:
            tm = cand
            break
    # Never over-pad tiny inputs; multiples of 16 keep bf16 sublane packing clean.
    return min(tm, _round_up(M, 16)), tn


def _hier_kernel(x_ref, w_enc_ref, b_enc_ref, w_dec_ref, b_dec_ref,
                 out_ref, h_ref):
    # NOTE: h_ref (bf16 encoder activations) is reused across the vocab axis,
    # so grid axis 1 MUST remain the innermost axis and be marked "arbitrary".

    # Encoder: [tm, Hp] @ [Hp, Hp] + bias, tanh -- once per token tile.
    @pl.when(pl.program_id(1) == 0)
    def _():
        h = jnp.dot(x_ref[...], w_enc_ref[...],
                    preferred_element_type=jnp.float32) + b_enc_ref[...]
        h_ref[...] = jnp.tanh(h).astype(jnp.bfloat16)

    # Decoder tile: [tm, Hp] @ [Hp, tn] -> [tm, tn] f32 logits.
    out_ref[...] = (jnp.dot(h_ref[...], w_dec_ref[...],
                            preferred_element_type=jnp.float32)
                    + b_dec_ref[...])


def prepare_params(params):
    """One-time prep: zero-pad H/V to lane multiples (256 multiples when large,
    for the 256x256 MXUs on v6e/v7x), cast matmul operands to bf16."""
    emb, w_enc = params["embedding"], params["w_enc"]
    b_enc, w_dec, b_dec = params["b_enc"], params["w_dec"], params["b_dec"]
    H = w_enc.shape[0]
    V = w_dec.shape[1]
    Hp = _round_up(H, 256 if H >= 256 else 128)
    Vp = _round_up(V, 256 if V >= 256 else 128)
    ph, pv = Hp - H, Vp - V
    return {
        "embedding": jnp.pad(emb, ((0, 0), (0, ph))).astype(jnp.bfloat16),    # [V, Hp]
        "w_enc":     jnp.pad(w_enc, ((0, ph), (0, ph))).astype(jnp.bfloat16),  # [Hp, Hp]
        "b_enc":     jnp.pad(b_enc, (0, ph)).reshape(1, Hp).astype(jnp.float32),
        "w_dec":     jnp.pad(w_dec, ((0, ph), (0, pv))).astype(jnp.bfloat16),  # [Hp, Vp]
        "b_dec":     jnp.pad(b_dec, (0, pv)).reshape(1, Vp).astype(jnp.float32),
        "H": H, "V": V, "Hp": Hp, "Vp": Vp,
    }


def hierarchical_forward(input_ids, pp, *, tm_max: int = 512, tn_max: int = 512):
    """input_ids: int32 [B, S] -> logits f32 [B, S, V]."""
    B, S = input_ids.shape
    M = B * S
    Hp, Vp, V = pp["Hp"], pp["Vp"], pp["V"]

    vmem_limit = _vmem_limit_bytes()
    tm, tn = _select_tiles(M, Hp, Vp, vmem_limit, tm_max=tm_max, tn_max=tn_max)
    Mp = _round_up(M, tm)

    # Encoder front half: embedding gather (glue, plain JAX gather in bf16).
    # TODO(synk): fuse this gather into the kernel via scalar-prefetched ids +
    # a per-row DMA gather from an HBM-resident table to cut the Mp*Hp
    # activation round trip through HBM.
    emb = jnp.take(pp["embedding"], input_ids.reshape(-1), axis=0)  # [M, Hp] bf16
    if Mp != M:
        emb = jnp.pad(emb, ((0, Mp - M), (0, 0)))

    grid = (Mp // tm, Vp // tn)

    # Resident (constant-index, never re-fetched) encoder params: single-buffer
    # them for large H so the Hp x Hp bf16 block doesn't take 2x VMEM.
    resident = {"pipeline_mode": pl.Buffered(1)} if Hp >= 512 else {}
    in_specs = [
        pl.BlockSpec((tm, Hp), lambda i, j: (i, 0)),               # activations
        pl.BlockSpec((Hp, Hp), lambda i, j: (0, 0), **resident),   # w_enc (resident)
        pl.BlockSpec((1, Hp), lambda i, j: (0, 0), **resident),    # b_enc (resident)
        # TODO(synk): on v5e, sweep pipeline_mode=pl.Buffered(3) on w_dec to
        # hide per-step DMA latency of the streamed decoder weight.
        pl.BlockSpec((Hp, tn), lambda i, j: (0, j)),               # w_dec vocab tile
        pl.BlockSpec((1, tn), lambda i, j: (0, j)),                # b_dec vocab tile
    ]

    cost = pl.CostEstimate(
        flops=2 * Mp * Hp * (Hp + Vp),
        transcendentals=Mp * Hp,
        bytes_accessed=(Mp * Hp * 2 + Hp * Hp * 2
                        + (Mp // tm) * Hp * Vp * 2
                        + Mp * Vp * 4 + (Hp + Vp) * 4),
    )

    out = pl.pallas_call(
        _hier_kernel,
        out_shape=jax.ShapeDtypeStruct((Mp, Vp), jnp.float32),
        grid_spec=pltpu.PrefetchScalarGridSpec(
            num_scalar_prefetch=0,
            grid=grid,
            in_specs=in_specs,
            out_specs=pl.BlockSpec((tm, tn), lambda i, j: (i, j)),
            scratch_shapes=[pltpu.VMEM((tm, Hp), jnp.bfloat16)],   # encoder h (bf16)
        ),
        compiler_params=pltpu.CompilerParams(
            # Token tiles independent -> "parallel" (megacore / 2-TC on v7x);
            # vocab axis carries the encoder scratch -> keep "arbitrary"/innermost.
            dimension_semantics=("parallel", "arbitrary"),
            vmem_limit_bytes=vmem_limit,
        ),
        cost_estimate=cost,
    )(emb, pp["w_enc"], pp["b_enc"], pp["w_dec"], pp["b_dec"])

    # Skip the post-kernel slice copy entirely when no padding was applied.
    if Mp == M and Vp == V:
        return out.reshape(B, S, V)
    # TODO(synk): when padding is non-trivial, prefer slicing at the consumer
    # (fusable) or a bf16 / fused-loss output to avoid this extra logits pass.
    return out[:M, :V].reshape(B, S, V)


def _reference_forward(input_ids, pp):
    """Pure-JAX reference mimicking the kernel's numerics (bf16 operands, f32 acc)."""
    emb = jnp.take(pp["embedding"], input_ids, axis=0).astype(jnp.float32)  # [B,S,Hp]
    h = jnp.tanh(emb @ pp["w_enc"].astype(jnp.float32) + pp["b_enc"])
    h = h.astype(jnp.bfloat16).astype(jnp.float32)
    logits = h @ pp["w_dec"].astype(jnp.float32) + pp["b_dec"]
    return logits[..., :pp["V"]]


def make_params(key, vocab=32, hidden=32):
    k0, k1, k2, k3, k4 = jax.random.split(key, 5)
    scale = 0.1
    return {
        "embedding": scale * jax.random.normal(k0, (vocab, hidden), jnp.float32),
        "w_enc":     scale * jax.random.normal(k1, (hidden, hidden), jnp.float32),
        "b_enc":     scale * jax.random.normal(k2, (hidden,), jnp.float32),
        "w_dec":     scale * jax.random.normal(k3, (hidden, vocab), jnp.float32),
        "b_dec":     scale * jax.random.normal(k4, (vocab,), jnp.float32),
    }


if __name__ == "__main__":
    key = jax.random.PRNGKey(0)
    k_param, k_ids = jax.random.split(key)

    B, S, V, H = 2, 8, 32, 32
    raw_params = make_params(k_param, vocab=V, hidden=H)
    pp = prepare_params(raw_params)
    input_ids = jax.random.randint(k_ids, (B, S), 0, V, dtype=jnp.int32)

    logits = hierarchical_forward(input_ids, pp)
    logits = jax.block_until_ready(logits)

    ref = _reference_forward(input_ids, pp)
    assert logits.shape == (B, S, V)
    assert jnp.allclose(logits, ref, atol=5e-3, rtol=5e-3), "mismatch vs reference"

    print("KERNEL_OK")
</pallas_src>

<mosaic_0001>
module attributes {stable_mosaic.version = 11 : i64} {
  func.func @_hier_kernel(%arg0: i32, %arg1: i32, %arg2: memref<16x128xbf16, #tpu.memory_space<vmem>>, %arg3: memref<128x128xbf16, #tpu.memory_space<vmem>>, %arg4: memref<1x128xf32, #tpu.memory_space<vmem>>, %arg5: memref<128x128xbf16, #tpu.memory_space<vmem>>, %arg6: memref<1x128xf32, #tpu.memory_space<vmem>>, %arg7: memref<16x128xf32, #tpu.memory_space<vmem>>, %arg8: memref<16x128xbf16, #tpu.memory_space<vmem>>) attributes {dimension_semantics = [#tpu.dimension_semantics<parallel>, #tpu.dimension_semantics<arbitrary>], iteration_bounds = array<i64: 1, 1>, scalar_prefetch = 0 : i64, scratch_operands = 1 : i64, tpu.core_type = #tpu.core_type<tc>, window_params = [{transform_indices = @transform_0, window_bounds = array<i64: 16, 128>}, {pipeline_mode = #tpu.pipeline_mode<synchronous>, transform_indices = @transform_1, window_bounds = array<i64: 128, 128>}, {pipeline_mode = #tpu.pipeline_mode<synchronous>, transform_indices = @transform_2, window_bounds = array<i64: 1, 128>}, {transform_indices = @transform_3, window_bounds = array<i64: 128, 128>}, {transform_indices = @transform_4, window_bounds = array<i64: 1, 128>}, {transform_indices = @transform_5, window_bounds = array<i64: 16, 128>}]} {
    %c0_i32 = arith.constant 0 : i32
    %0 = arith.cmpi eq, %arg1, %c0_i32 : i32
    %1 = arith.extui %0 : i1 to i32
    %c0_i32_0 = arith.constant 0 : i32
    %2 = arith.cmpi ne, %1, %c0_i32_0 : i32
    scf.if %2 {
      %c0_8 = arith.constant 0 : index
      %c0_9 = arith.constant 0 : index
      %10 = vector.load %arg2[%c0_8, %c0_9] : memref<16x128xbf16, #tpu.memory_space<vmem>>, vector<16x128xbf16>
      %c0_10 = arith.constant 0 : index
      %c0_11 = arith.constant 0 : index
      %11 = vector.load %arg3[%c0_10, %c0_11] : memref<128x128xbf16, #tpu.memory_space<vmem>>, vector<128x128xbf16>
      %cst_12 = arith.constant dense<0.000000e+00> : vector<16x128xf32>
      %12 = tpu.matmul %10, %11, %cst_12 {dimension_numbers = #tpu.dot_dimension_numbers<[1], [0], [0], [1], [0, 0, 1, 1], [], []>} : vector<16x128xbf16>, vector<128x128xbf16>, vector<16x128xf32> -> vector<16x128xf32>
      %c0_13 = arith.constant 0 : index
      %c0_14 = arith.constant 0 : index
      %13 = vector.load %arg4[%c0_13, %c0_14] : memref<1x128xf32, #tpu.memory_space<vmem>>, vector<1x128xf32>
      %14 = vector.broadcast %13 : vector<1x128xf32> to vector<16x128xf32>
      %15 = arith.addf %12, %14 : vector<16x128xf32>
      %16 = math.tanh %15 : vector<16x128xf32>
      %17 = arith.truncf %16 : vector<16x128xf32> to vector<16x128xbf16>
      %c0_15 = arith.constant 0 : index
      %c0_16 = arith.constant 0 : index
      %18 = vector.load %arg8[%c0_15, %c0_16] : memref<16x128xbf16, #tpu.memory_space<vmem>>, vector<16x128xbf16>
      tpu.vector_store %arg8[%c0_15, %c0_16], %17 {strides = array<i32>} : memref<16x128xbf16, #tpu.memory_space<vmem>>, vector<16x128xbf16>,
    } else {
    }
    %c0 = arith.constant 0 : index
    %c0_1 = arith.constant 0 : index
    %3 = vector.load %arg8[%c0, %c0_1] : memref<16x128xbf16, #tpu.memory_space<vmem>>, vector<16x128xbf16>
    %c0_2 = arith.constant 0 : index
    %c0_3 = arith.constant 0 : index
    %4 = vector.load %arg5[%c0_2, %c0_3] : memref<128x128xbf16, #tpu.memory_space<vmem>>, vector<128x128xbf16>
    %cst = arith.constant dense<0.000000e+00> : vector<16x128xf32>
    %5 = tpu.matmul %3, %4, %cst {dimension_numbers = #tpu.dot_dimension_numbers<[1], [0], [0], [1], [0, 0, 1, 1], [], []>} : vector<16x128xbf16>, vector<128x128xbf16>, vector<16x128xf32> -> vector<16x128xf32>
    %c0_4 = arith.constant 0 : index
    %c0_5 = arith.constant 0 : index
    %6 = vector.load %arg6[%c0_4, %c0_5] : memref<1x128xf32, #tpu.memory_space<vmem>>, vector<1x128xf32>
    %7 = vector.broadcast %6 : vector<1x128xf32> to vector<16x128xf32>
    %8 = arith.addf %5, %7 : vector<16x128xf32>
    %c0_6 = arith.constant 0 : index
    %c0_7 = arith.constant 0 : index
    %9 = vector.load %arg7[%c0_6, %c0_7] : memref<16x128xf32, #tpu.memory_space<vmem>>, vector<16x128xf32>
    tpu.vector_store %arg7[%c0_6, %c0_7], %8 {strides = array<i32>} : memref<16x128xf32, #tpu.memory_space<vmem>>, vector<16x128xf32>,
    return
  }
  func.func @transform_0(%arg0: i32, %arg1: i32) -> (i32, i32) {
    %c0_i32 = arith.constant 0 : i32
    %c0_i32_0 = arith.constant 0 : i32
    return %arg0, %c0_i32 : i32, i32
  }
  func.func @transform_1(%arg0: i32, %arg1: i32) -> (i32, i32) {
    %c0_i32 = arith.constant 0 : i32
    %c0_i32_0 = arith.constant 0 : i32
    %c0_i32_1 = arith.constant 0 : i32
    return %c0_i32, %c0_i32_0 : i32, i32
  }
  func.func @transform_2(%arg0: i32, %arg1: i32) -> (i32, i32) {
    %c0_i32 = arith.constant 0 : i32
    %c0_i32_0 = arith.constant 0 : i32
    %c0_i32_1 = arith.constant 0 : i32
    return %c0_i32, %c0_i32_0 : i32, i32
  }
  func.func @transform_3(%arg0: i32, %arg1: i32) -> (i32, i32) {
    %c0_i32 = arith.constant 0 : i32
    %c0_i32_0 = arith.constant 0 : i32
    return %c0_i32, %arg1 : i32, i32
  }
  func.func @transform_4(%arg0: i32, %arg1: i32) -> (i32, i32) {
    %c0_i32 = arith.constant 0 : i32
    %c0_i32_0 = arith.constant 0 : i32
    return %c0_i32, %arg1 : i32, i32
  }
  func.func @transform_5(%arg0: i32, %arg1: i32) -> (i32, i32) {
    %c0_i32 = arith.constant 0 : i32
    return %arg0, %arg1 : i32, i32
  }
}

</mosaic_0001>

<llo_original>
// kernel: tpu_custom_call.1
$region0: #{tpu_custom_call.1}
  #allocation0 [shape = 'u32[]', space=smem, size = 0x4, offset = 0x4, fixed_abs, tag = 'smem constant byte address 0x4 - core index']
  #allocation1 [shape = 'u32[144,128]{1,0:T(1,128)}', space=vmem, size = 0x12000, scoped, tag = 'internal scratch']
  #allocation2 [shape = 'bf16[16,128]{1,0:T(16,128)(2,1)}', space=vmem, size = 0x1000, scoped, tag = 'scratch operand']
  %s0 = inlined_call_operand.hbm [shape: bf16[16,128], index: 0, kind: input, shape index: {}]
  %s1 = inlined_call_operand.hbm [shape: bf16[128,128], index: 1, kind: input, shape index: {}]
  %s2 = inlined_call_operand.vmem [shape: f32[1,128], index: 2, kind: input, shape index: {}]
  %s3 = inlined_call_operand.hbm [shape: bf16[128,128], index: 3, kind: input, shape index: {}]
  %s4 = inlined_call_operand.vmem [shape: f32[1,128], index: 4, kind: input, shape index: {}]
  %s5 = inlined_call_operand.hbm [shape: f32[16,128], index: 5, kind: output, shape index: {}]
  %s6 = sld [smem:[#allocation0]]
  $region46: #{tpu_custom_call.1} parent=0
    _
  %s8 = ssub.s32 1, %s6
  %s9 = scalar_select 0, %s8, %s6
  $region1: #{tpu_custom_call.1} parent=0
    #allocation3 [shape = 'u8[4096]{0}', space=vmem, size = 0x1000, scoped, tag = 'input window, operand 0, single buffered']
    #allocation4 [shape = 's32[1]{0}', space=sflag, size = 0x4, scoped, tag = 'scoped memory for tpu_custom_call.1']
    #allocation5 [shape = 's32[1]{0}', space=sflag, size = 0x4, scoped, tag = 'scoped memory for tpu_custom_call.1']
    #allocation6 [shape = 'u8[32768]{0}', space=vmem, size = 0x8000, scoped, tag = 'input window, operand 1, single buffered']
    #allocation7 [shape = 's32[1]{0}', space=sflag, size = 0x4, scoped, tag = 'scoped memory for tpu_custom_call.1']
    #allocation8 [shape = 'u8[32768]{0}', space=vmem, size = 0x8000, scoped, tag = 'input window, operand 3, single buffered']
    #allocation9 [shape = 'u8[8192]{0}', space=vmem, size = 0x2000, scoped, tag = 'output window, operand 0, single buffered']
    %10 = vsyncpa [#allocation4], 0
    %11 = vsyncpa [#allocation7], 0
    %12 = vsyncpa [#allocation5], 0
    // Predicated region
    $region2: #{tpu_custom_call.1} parent=1 // pred_check
      _
    $region3: #{tpu_custom_call.1} parent=1 // pred_check_branch
      %14 = sbr.rel (0) target = $region5
    $region4: #{tpu_custom_call.1} parent=1 // pred_region
      %s16 = ssub.s32 128, 128
      %17 = vsyncadd [#allocation4], %s16
      %s18 = sshll.u32 [#allocation3], 4
      %s19 = int_to_ptr.vmem [resolvable:$true] %s18
      %24 = dma.hbm_to_vmem [thread:$0]  %s0, 128, %s19, [#allocation4], 64, 64, 4
    $region5: #{tpu_custom_call.1} parent=1 // pred_fallthru
      _
    // Predicated region
    $region6: #{tpu_custom_call.1} parent=1 // pred_check
      _
    $region7: #{tpu_custom_call.1} parent=1 // pred_check_branch
      %26 = sbr.rel (0) target = $region9
    $region8: #{tpu_custom_call.1} parent=1 // pred_region
      %s28 = ssub.s32 1024, 1024
      %29 = vsyncadd [#allocation7], %s28
      %s30 = sshll.u32 [#allocation6], 4
      %s31 = int_to_ptr.vmem [resolvable:$true] %s30
      %36 = dma.hbm_to_vmem [thread:$0]  %s1, 1024, %s31, [#allocation7], 64, 64, 4
    $region9: #{tpu_custom_call.1} parent=1 // pred_fallthru
      _
    // Predicated region
    $region10: #{tpu_custom_call.1} parent=1 // pred_check
      _
    $region11: #{tpu_custom_call.1} parent=1 // pred_check_branch
      %38 = sbr.rel (0) target = $region13
    $region12: #{tpu_custom_call.1} parent=1 // pred_region
      _
    $region13: #{tpu_custom_call.1} parent=1 // pred_fallthru
      _
    // Predicated region
    $region14: #{tpu_custom_call.1} parent=1 // pred_check
      _
    $region15: #{tpu_custom_call.1} parent=1 // pred_check_branch
      %40 = sbr.rel (0) target = $region17
    $region16: #{tpu_custom_call.1} parent=1 // pred_region
      %s42 = ssub.s32 1024, 1024
      %43 = vsyncadd [#allocation7], %s42
      %s44 = sshll.u32 [#allocation8], 4
      %s45 = int_to_ptr.vmem [resolvable:$true] %s44
      %50 = dma.hbm_to_vmem [thread:$0]  %s3, 1024, %s45, [#allocation7], 64, 64, 4
    $region17: #{tpu_custom_call.1} parent=1 // pred_fallthru
      _
    // Predicated region
    $region18: #{tpu_custom_call.1} parent=1 // pred_check
      _
    $region19: #{tpu_custom_call.1} parent=1 // pred_check_branch
      %52 = sbr.rel (0) target = $region21
    $region20: #{tpu_custom_call.1} parent=1 // pred_region
      _
    $region21: #{tpu_custom_call.1} parent=1 // pred_fallthru
      _
    // Predicated region
    $region22: #{tpu_custom_call.1} parent=1 // pred_check
      _
    $region23: #{tpu_custom_call.1} parent=1 // pred_check_branch
      %54 = sbr.rel (0) target = $region25
    $region24: #{tpu_custom_call.1} parent=1 // pred_region
      %55 = dma.done [#allocation4], 128
    $region25: #{tpu_custom_call.1} parent=1 // pred_fallthru
      _
    // Predicated region
    $region26: #{tpu_custom_call.1} parent=1 // pred_check
      _
    $region27: #{tpu_custom_call.1} parent=1 // pred_check_branch
      %57 = sbr.rel (0) target = $region29
    $region28: #{tpu_custom_call.1} parent=1 // pred_region
      %58 = dma.done [#allocation7], 1024
    $region29: #{tpu_custom_call.1} parent=1 // pred_fallthru
      _
    // Predicated region
    $region30: #{tpu_custom_call.1} parent=1 // pred_check
      _
    $region31: #{tpu_custom_call.1} parent=1 // pred_check_branch
      %60 = sbr.rel (0) target = $region33
    $region32: #{tpu_custom_call.1} parent=1 // pred_region
      %61 = dma.done [#allocation7], 1024
    $region33: #{tpu_custom_call.1} parent=1 // pred_fallthru
      _
    %p63 = scmp.eq.s32.totalorder 0, 0
    // Predicated region
    $region34: #{tpu_custom_call.1} parent=1 // pred_check
      %p64 = pneg %p63
    $region35: #{tpu_custom_call.1} parent=1 // pred_check_branch
      %66 = sbr.rel (%p64) target = $region37
    $region36: #{tpu_custom_call.1} parent=1 // pred_region
      %v67 = vld [vmem:[#allocation3] sm:$0xf]
      %v68 = vld [vmem:[#allocation3 + $0x4] sm:$0xf]
      %v69 = vld [vmem:[#allocation6] sm:$0xf]
      %v70 = vld [vmem:[#allocation6 + $0x4] sm:$0xf]
      %v71 = vld [vmem:[#allocation6 + $0x8] sm:$0xf]
      %v72 = vld [vmem:[#allocation6 + $0xc] sm:$0xf]
      %v73 = vld [vmem:[#allocation6 + $0x10] sm:$0xf]
      %v74 = vld [vmem:[#allocation6 + $0x14] sm:$0xf]
      %v75 = vld [vmem:[#allocation6 + $0x18] sm:$0xf]
      %v76 = vld [vmem:[#allocation6 + $0x1c] sm:$0xf]
      %v77 = vld [vmem:[#allocation6 + $0x20] sm:$0xf]
      %v78 = vld [vmem:[#allocation6 + $0x24] sm:$0xf]
      %v79 = vld [vmem:[#allocation6 + $0x28] sm:$0xf]
      %v80 = vld [vmem:[#allocation6 + $0x2c] sm:$0xf]
      %v81 = vld [vmem:[#allocation6 + $0x30] sm:$0xf]
      %v82 = vld [vmem:[#allocation6 + $0x34] sm:$0xf]
      %v83 = vld [vmem:[#allocation6 + $0x38] sm:$0xf]
      %v84 = vld [vmem:[#allocation6 + $0x3c] sm:$0xf]
      %v85 = vld [vmem:[%s2] sm:$0x1]
      %v87 = vlaneseq
      %v88 = vshrl.u32 %v87, 7
      %v89 = vsub.s32 0, %v88
      %v90 = vrot.slane %v85, %v89
      %v94 = vunpack.c.l.b16 %v67
      %v95 = vunpack.c.l.b16 %v68
      %v96 = vpack.c.b16 %v95, %v94
      %v114 = vunpack.c.l.b16 %v69
      %v115 = vunpack.c.l.b16 %v70
      %v116 = vunpack.c.l.b16 %v71
      %v117 = vunpack.c.l.b16 %v72
      %v118 = vunpack.c.l.b16 %v73
      %v119 = vunpack.c.l.b16 %v74
      %v120 = vunpack.c.l.b16 %v75
      %v121 = vunpack.c.l.b16 %v76
      %v122 = vunpack.c.l.b16 %v77
      %v123 = vunpack.c.l.b16 %v78
      %v124 = vunpack.c.l.b16 %v79
      %v125 = vunpack.c.l.b16 %v80
      %v126 = vunpack.c.l.b16 %v81
      %v127 = vunpack.c.l.b16 %v82
      %v128 = vunpack.c.l.b16 %v83
      %v129 = vunpack.c.l.b16 %v84
      %v130 = vpack.c.b16 %v115, %v114
      %v131 = vpack.c.b16 %v117, %v116
      %v132 = vpack.c.b16 %v119, %v118
      %v133 = vpack.c.b16 %v121, %v120
      %v134 = vpack.c.b16 %v123, %v122
      %v135 = vpack.c.b16 %v125, %v124
      %v136 = vpack.c.b16 %v127, %v126
      %v137 = vpack.c.b16 %v129, %v128
      %146 = vmatprep.subr.bf16.mxu0 0
      %147 = vmatpush1.bf16.msra.mxu0 %v130
      %148 = vmatprep.subr.bf16.mxu0 0
      %149 = vmatpush1.bf16.msra.mxu0 %v131
      %150 = vmatprep.subr.bf16.mxu0 0
      %151 = vmatpush1.bf16.msra.mxu0 %v132
      %152 = vmatprep.subr.bf16.mxu0 0
      %153 = vmatpush1.bf16.msra.mxu0 %v133
      %154 = vmatprep.subr.bf16.mxu0 0
      %155 = vmatpush1.bf16.msra.mxu0 %v134
      %156 = vmatprep.subr.bf16.mxu0 0
      %157 = vmatpush1.bf16.msra.mxu0 %v135
      %158 = vmatprep.subr.bf16.mxu0 0
      %159 = vmatpush1.bf16.msra.mxu0 %v136
      %160 = vmatprep.subr.bf16.mxu0 0
      %161 = vmatpush1.bf16.msra.mxu0 %v137
      %162 = vmatprep.subr.bf16.mxu0 0
      %163 = vmatpush1.bf16.msra.mxu0 0
      %164 = vmatprep.subr.bf16.mxu0 0
      %165 = vmatpush1.bf16.msra.mxu0 0
      %166 = vmatprep.subr.bf16.mxu0 0
      %167 = vmatpush1.bf16.msra.mxu0 0
      %168 = vmatprep.subr.bf16.mxu0 0
      %169 = vmatpush1.bf16.msra.mxu0 0
      %170 = vmatprep.subr.bf16.mxu0 0
      %171 = vmatpush1.bf16.msra.mxu0 0
      %172 = vmatprep.subr.bf16.mxu0 0
      %173 = vmatpush1.bf16.msra.mxu0 0
      %174 = vmatprep.subr.bf16.mxu0 0
      %175 = vmatpush1.bf16.msra.mxu0 0
      %176 = vmatprep.subr.bf16.mxu0 0
      %177 = vmatpush1.bf16.msra.mxu0 0
      %178 = vmatprep.mubr.bf16.mxu0 0
      %179 = vmatmul.mubr.bf16.gmra.mrb[0].mxu0 %v96
      %v180 = vpop.f32.mrb[0].mxu0
      %v181 = vadd.f32 %v90, %v180
      %v182 = vpop.f32.mrb[0].mxu0
      %v183 = vpop.f32.mrb[0].mxu0
      %v184 = vadd.f32 %v90, %v183
      %v185 = vpop.f32.mrb[0].mxu0
      %186 = vdwg.mxu0
      %v187 = vtanh.pop %v181
      %v188 = vtanh.pop %v184
      %v189 = vpack.c.bf16 %v188, %v187
      %190 = vst [vmem:[#allocation2] sm:$0xff] %v189
    $region37: #{tpu_custom_call.1} parent=1 // pred_fallthru
      _
    %v191 = vld [vmem:[#allocation2] sm:$0xff]
    %v192 = vld [vmem:[#allocation8] sm:$0xf]
    %v193 = vld [vmem:[#allocation8 + $0x4] sm:$0xf]
    %v194 = vld [vmem:[#allocation8 + $0x8] sm:$0xf]
    %v195 = vld [vmem:[#allocation8 + $0xc] sm:$0xf]
    %v196 = vld [vmem:[#allocation8 + $0x10] sm:$0xf]
    %v197 = vld [vmem:[#allocation8 + $0x14] sm:$0xf]
    %v198 = vld [vmem:[#allocation8 + $0x18] sm:$0xf]
    %v199 = vld [vmem:[#allocation8 + $0x1c] sm:$0xf]
    %v200 = vld [vmem:[#allocation8 + $0x20] sm:$0xf]
    %v201 = vld [vmem:[#allocation8 + $0x24] sm:$0xf]
    %v202 = vld [vmem:[#allocation8 + $0x28] sm:$0xf]
    %v203 = vld [vmem:[#allocation8 + $0x2c] sm:$0xf]
    %v204 = vld [vmem:[#allocation8 + $0x30] sm:$0xf]
    %v205 = vld [vmem:[#allocation8 + $0x34] sm:$0xf]
    %v206 = vld [vmem:[#allocation8 + $0x38] sm:$0xf]
    %v207 = vld [vmem:[#allocation8 + $0x3c] sm:$0xf]
    %v208 = vld [vmem:[%s4] sm:$0x1]
    %v210 = vlaneseq
    %v211 = vshrl.u32 %v210, 7
    %v212 = vsub.s32 0, %v211
    %v213 = vrot.slane %v208, %v212
    %v231 = vunpack.c.l.b16 %v192
    %v232 = vunpack.c.l.b16 %v193
    %v233 = vunpack.c.l.b16 %v194
    %v234 = vunpack.c.l.b16 %v195
    %v235 = vunpack.c.l.b16 %v196
    %v236 = vunpack.c.l.b16 %v197
    %v237 = vunpack.c.l.b16 %v198
    %v238 = vunpack.c.l.b16 %v199
    %v239 = vunpack.c.l.b16 %v200
    %v240 = vunpack.c.l.b16 %v201
    %v241 = vunpack.c.l.b16 %v202
    %v242 = vunpack.c.l.b16 %v203
    %v243 = vunpack.c.l.b16 %v204
    %v244 = vunpack.c.l.b16 %v205
    %v245 = vunpack.c.l.b16 %v206
    %v246 = vunpack.c.l.b16 %v207
    %v247 = vpack.c.b16 %v232, %v231
    %v248 = vpack.c.b16 %v234, %v233
    %v249 = vpack.c.b16 %v236, %v235
    %v250 = vpack.c.b16 %v238, %v237
    %v251 = vpack.c.b16 %v240, %v239
    %v252 = vpack.c.b16 %v242, %v241
    %v253 = vpack.c.b16 %v244, %v243
    %v254 = vpack.c.b16 %v246, %v245
    %263 = vmatprep.subr.bf16.mxu0 0
    %264 = vmatpush1.bf16.msra.mxu0 %v247
    %265 = vmatprep.subr.bf16.mxu0 0
    %266 = vmatpush1.bf16.msra.mxu0 %v248
    %267 = vmatprep.subr.bf16.mxu0 0
    %268 = vmatpush1.bf16.msra.mxu0 %v249
    %269 = vmatprep.subr.bf16.mxu0 0
    %270 = vmatpush1.bf16.msra.mxu0 %v250
    %271 = vmatprep.subr.bf16.mxu0 0
    %272 = vmatpush1.bf16.msra.mxu0 %v251
    %273 = vmatprep.subr.bf16.mxu0 0
    %274 = vmatpush1.bf16.msra.mxu0 %v252
    %275 = vmatprep.subr.bf16.mxu0 0
    %276 = vmatpush1.bf16.msra.mxu0 %v253
    %277 = vmatprep.subr.bf16.mxu0 0
    %278 = vmatpush1.bf16.msra.mxu0 %v254
    %279 = vmatprep.subr.bf16.mxu0 0
    %280 = vmatpush1.bf16.msra.mxu0 0
    %281 = vmatprep.subr.bf16.mxu0 0
    %282 = vmatpush1.bf16.msra.mxu0 0
    %283 = vmatprep.subr.bf16.mxu0 0
    %284 = vmatpush1.bf16.msra.mxu0 0
    %285 = vmatprep.subr.bf16.mxu0 0
    %286 = vmatpush1.bf16.msra.mxu0 0
    %287 = vmatprep.subr.bf16.mxu0 0
    %288 = vmatpush1.bf16.msra.mxu0 0
    %289 = vmatprep.subr.bf16.mxu0 0
    %290 = vmatpush1.bf16.msra.mxu0 0
    %291 = vmatprep.subr.bf16.mxu0 0
    %292 = vmatpush1.bf16.msra.mxu0 0
    %293 = vmatprep.subr.bf16.mxu0 0
    %294 = vmatpush1.bf16.msra.mxu0 0
    %295 = vmatprep.mubr.bf16.mxu0 0
    %296 = vmatmul.mubr.bf16.gmra.mrb[0].mxu0 %v191
    %v297 = vpop.f32.mrb[0].mxu0
    %v298 = vadd.f32 %v213, %v297
    %v299 = vpop.f32.mrb[0].mxu0
    %v300 = vpop.f32.mrb[0].mxu0
    %v301 = vadd.f32 %v213, %v300
    %v302 = vpop.f32.mrb[0].mxu0
    %303 = vdwg.mxu0
    %304 = vst [vmem:[#allocation9] sm:$0xff] %v298
    %305 = vst [vmem:[#allocation9 + $0x8] sm:$0xff] %v301
    // Predicated region
    $region38: #{tpu_custom_call.1} parent=1 // pred_check
      _
    $region39: #{tpu_custom_call.1} parent=1 // pred_check_branch
      %307 = sbr.rel (0) target = $region41
    $region40: #{tpu_custom_call.1} parent=1 // pred_region
      %s309 = ssub.s32 256, 256
      %310 = vsyncadd [#allocation5], %s309
      %s311 = sshll.u32 [#allocation9], 4
      %s312 = int_to_ptr.vmem [resolvable:$true] %s311
      %317 = dma.vmem_to_hbm [thread:$0]  %s312, 256, %s5, [#allocation5], 128, 128, 8
    $region41: #{tpu_custom_call.1} parent=1 // pred_fallthru
      _
    // Predicated region
    $region42: #{tpu_custom_call.1} parent=1 // pred_check
      _
    $region43: #{tpu_custom_call.1} parent=1 // pred_check_branch
      %319 = sbr.rel (0) target = $region45
    $region44: #{tpu_custom_call.1} parent=1 // pred_region
      %320 = dma.done [#allocation5], 256
    $region45: #{tpu_custom_call.1} parent=1 // pred_fallthru
      _
    %321 = vsyncpa [#allocation4], 1
    %322 = vsyncpa [#allocation7], 1
    %323 = vsyncpa [#allocation5], 1

</llo_original>
